<compile_context>
chip_gen: v7x
topology: tpu7x:2x2x1
jax: 0.10.0
libtpu: 0.0.40
codegen_flags: <defaults>
</compile_context>

<pallas_src>
import jax
import jax.numpy as jnp
from jax.experimental import pallas as pl
from jax.experimental.pallas import tpu as pltpu

LANE = 128      # vreg lane width
SUBLANE = 16    # bf16 sublane packing (also satisfies the 8-row f32 rule)
_MARGIN = 2 << 20


def _round_up(n, m):
    return ((n + m - 1) // m) * m


def _vmem_budget_bytes():
    """Generation-aware VMEM cap with headroom for compiler-internal scratch."""
    try:
        cap = pltpu.get_tpu_info().vmem_capacity_bytes
    except Exception:
        cap = 64 * 2**20            # conservative fallback (v7x per-TC size)
    # ~81% of physical: ~52 MiB on v7x (64 MiB/TC), ~104 MiB on v5e/v6e (128 MiB).
    return int(cap * 13 // 16)


# ----------------------------------------------------------------------------
# Kernels
# ----------------------------------------------------------------------------
def _fused_kernel(x_ref, w1_ref, b1_ref, w2_ref, b2_ref, o_ref):
    """Weights fully VMEM-resident: two MXU matmuls + VPU bias/ReLU, fused."""
    cdt = w1_ref.dtype
    h = jnp.dot(x_ref[...].astype(cdt), w1_ref[...],
                preferred_element_type=jnp.float32) + b1_ref[...]
    h = jnp.maximum(h, 0.0)
    y = jnp.dot(h.astype(cdt), w2_ref[...],
                preferred_element_type=jnp.float32) + b2_ref[...]
    o_ref[...] = y.astype(o_ref.dtype)


def _htiled_kernel(x_ref, w1_ref, b1_ref, w2_ref, b2_ref, o_ref, acc_ref):
    """Hidden-axis (H) tiled fallback: accumulate partial products in f32."""
    h_idx = pl.program_id(1)

    @pl.when(h_idx == 0)
    def _():
        acc_ref[...] = jnp.zeros_like(acc_ref)

    cdt = w1_ref.dtype
    h = jnp.dot(x_ref[...].astype(cdt), w1_ref[...],
                preferred_element_type=jnp.float32) + b1_ref[...]
    h = jnp.maximum(h, 0.0)
    acc_ref[...] += jnp.dot(h.astype(cdt), w2_ref[...],
                            preferred_element_type=jnp.float32)

    @pl.when(h_idx == pl.num_programs(1) - 1)
    def _():
        o_ref[...] = (acc_ref[...] + b2_ref[...]).astype(o_ref.dtype)


# ----------------------------------------------------------------------------
# One-time parameter preparation (pad hidden axis, cast to compute dtype)
# ----------------------------------------------------------------------------
def prepare_params(w1, b1, w2, b2, *, compute_dtype=jnp.bfloat16):
    """w1: [D_in, H], b1: [H], w2: [H, D_out], b2: [D_out].

    (PyTorch stores Linear weights as [out, in]; pass them transposed.)
    Pads the hidden axis to a multiple of 128 lanes (mathematically exact: the
    extra columns produce 0 after bias+ReLU and contribute 0 to the 2nd matmul)
    and casts weights to compute_dtype.  Biases stay f32.  Call once, reuse.
    """
    d_in, hidden = w1.shape
    d_out = w2.shape[1]
    h_p = _round_up(hidden, LANE)
    w1p = jnp.zeros((d_in, h_p), compute_dtype).at[:, :hidden].set(
        w1.astype(compute_dtype))
    b1p = jnp.zeros((1, h_p), jnp.float32).at[:, :hidden].set(
        jnp.reshape(b1, (1, -1)).astype(jnp.float32))
    w2p = jnp.zeros((h_p, d_out), compute_dtype).at[:hidden, :].set(
        w2.astype(compute_dtype))
    b2p = jnp.reshape(b2, (1, -1)).astype(jnp.float32)
    return w1p, b1p, w2p, b2p


# ----------------------------------------------------------------------------
# Forward pass
# ----------------------------------------------------------------------------
def two_layer_net(x, w1p, b1p, w2p, b2p, *, block_m=512, out_dtype=None,
                  hidden_block=None):
    """x: [N, D_in]; (w1p, b1p, w2p, b2p) from prepare_params()."""
    N, D_in = x.shape
    h_p = w1p.shape[1]
    D_out = w2p.shape[1]
    out_dtype = x.dtype if out_dtype is None else out_dtype

    cbytes = jnp.dtype(w1p.dtype).itemsize
    xbytes = jnp.dtype(x.dtype).itemsize
    obytes = jnp.dtype(out_dtype).itemsize
    budget = _vmem_budget_bytes()

    # ---- Batch tile: multiple of 16 sublanes, no HBM padding of N ------------
    tm = _round_up(min(block_m, N), SUBLANE)
    if pl.cdiv(N, tm) == 1 and N >= 4 * SUBLANE:
        # Split a single-tile batch so the "parallel" axis can use both v7x TCs.
        tm = _round_up(pl.cdiv(N, 2), SUBLANE)
    grid_m = pl.cdiv(N, tm)

    flops = 2 * N * (D_in * h_p + h_p * D_out)

    # ---- Path A: weights fully resident (single-buffered) --------------------
    resident_w_bytes = (D_in * h_p + h_p * D_out) * cbytes + (h_p + D_out) * 4
    vmem_est_a = (resident_w_bytes
                  + 2 * tm * D_in * xbytes      # double-buffered x tiles
                  + 2 * tm * D_out * obytes     # double-buffered out tiles
                  + tm * h_p * 4                # f32 hidden intermediate
                  + tm * D_out * 4)             # f32 y

    if hidden_block is None and vmem_est_a + _MARGIN <= budget:
        vmem_limit = int(min(budget, max(32 * 2**20, vmem_est_a + _MARGIN)))
        cost = pl.CostEstimate(
            flops=flops, transcendentals=0,
            bytes_accessed=(N * D_in * xbytes + resident_w_bytes
                            + N * D_out * obytes))

        def build(resident_kwargs):
            return pl.pallas_call(
                _fused_kernel,
                out_shape=jax.ShapeDtypeStruct((N, D_out), out_dtype),
                grid=(grid_m,),
                in_specs=[
                    pl.BlockSpec((tm, D_in), lambda i: (i, 0)),              # x
                    pl.BlockSpec((D_in, h_p), lambda i: (0, 0), **resident_kwargs),
                    pl.BlockSpec((1, h_p), lambda i: (0, 0), **resident_kwargs),
                    pl.BlockSpec((h_p, D_out), lambda i: (0, 0), **resident_kwargs),
                    pl.BlockSpec((1, D_out), lambda i: (0, 0), **resident_kwargs),
                ],
                out_specs=pl.BlockSpec((tm, D_out), lambda i: (i, 0)),
                compiler_params=pltpu.CompilerParams(
                    dimension_semantics=("parallel",),
                    vmem_limit_bytes=vmem_limit),
                cost_estimate=cost,
            )

        try:
            # Constant-index weight/bias blocks never need double-buffering.
            return build({"pipeline_mode": pl.Buffered(1)})(x, w1p, b1p, w2p, b2p)
        except Exception:
            # TODO(synk): drop once Buffered(1) is guaranteed on all jax versions.
            return build({})(x, w1p, b1p, w2p, b2p)

    # ---- Path B: hidden-axis tiling (weights too big to sit resident) --------
    def htiled_step_bytes(th):
        return (2 * (D_in * th + th * D_out) * cbytes + 2 * th * 4  # W1/W2/b1 slabs (2-buf)
                + D_out * 4                                         # b2
                + 2 * tm * D_in * xbytes + 2 * tm * D_out * obytes  # x / out tiles
                + tm * th * 4 + tm * D_out * 4)                     # hidden + f32 acc

    if hidden_block is not None:
        th = hidden_block
    else:
        m = h_p // LANE
        th = LANE
        for d in range(1, m + 1):
            if m % d == 0 and htiled_step_bytes(LANE * d) + _MARGIN <= budget:
                th = max(th, LANE * d)
    assert th % LANE == 0 and h_p % th == 0, \
        "hidden_block must be a multiple of 128 that divides the padded hidden dim"
    grid_h = h_p // th

    vmem_est_b = htiled_step_bytes(th)
    vmem_limit = int(min(budget, max(32 * 2**20, vmem_est_b + _MARGIN)))
    cost = pl.CostEstimate(
        flops=flops, transcendentals=0,
        bytes_accessed=(N * D_in * xbytes
                        + grid_m * ((D_in * h_p + h_p * D_out) * cbytes + h_p * 4)
                        + D_out * 4 + N * D_out * obytes))

    return pl.pallas_call(
        _htiled_kernel,
        out_shape=jax.ShapeDtypeStruct((N, D_out), out_dtype),
        grid=(grid_m, grid_h),
        in_specs=[
            pl.BlockSpec((tm, D_in), lambda i, h: (i, 0)),    # x (reused across h)
            pl.BlockSpec((D_in, th), lambda i, h: (0, h)),    # W1 h-slab (pipelined)
            pl.BlockSpec((1, th), lambda i, h: (0, h)),       # b1 h-slab
            pl.BlockSpec((th, D_out), lambda i, h: (h, 0)),   # W2 h-slab (pipelined)
            pl.BlockSpec((1, D_out), lambda i, h: (0, 0)),    # b2
        ],
        out_specs=pl.BlockSpec((tm, D_out), lambda i, h: (i, 0)),
        scratch_shapes=[pltpu.VMEM((tm, D_out), jnp.float32)],
        compiler_params=pltpu.CompilerParams(
            dimension_semantics=("parallel", "arbitrary"),
            vmem_limit_bytes=vmem_limit),
        cost_estimate=cost,
    )(x, w1p, b1p, w2p, b2p)


# ----------------------------------------------------------------------------
# Demo / self-test
# ----------------------------------------------------------------------------
if __name__ == "__main__":
    N, D_in, H, D_out = 8, 64, 256, 32
    key = jax.random.PRNGKey(0)
    kx, kw1, kb1, kw2, kb2, kx2 = jax.random.split(key, 6)

    x = jax.random.normal(kx, (N, D_in), jnp.float32)

    # PyTorch nn.Linear default init: U(-1/sqrt(fan_in), 1/sqrt(fan_in)).
    # Weights are stored pre-transposed ([in, out]) so the kernel computes x @ W.
    bound1 = 1.0 / (D_in ** 0.5)
    bound2 = 1.0 / (H ** 0.5)
    w1 = jax.random.uniform(kw1, (D_in, H), jnp.float32, -bound1, bound1)
    b1 = jax.random.uniform(kb1, (H,), jnp.float32, -bound1, bound1)
    w2 = jax.random.uniform(kw2, (H, D_out), jnp.float32, -bound2, bound2)
    b2 = jax.random.uniform(kb2, (D_out,), jnp.float32, -bound2, bound2)

    def ref_f32(xv):   # exact f32 forward (the PyTorch module semantics)
        h = jnp.maximum(jnp.dot(xv, w1, precision=jax.lax.Precision.HIGHEST) + b1, 0.0)
        return jnp.dot(h, w2, precision=jax.lax.Precision.HIGHEST) + b2

    def ref_bf16(xv):  # same bf16-in / f32-accumulate numerics as the kernel
        h = jnp.dot(xv.astype(jnp.bfloat16), w1.astype(jnp.bfloat16),
                    preferred_element_type=jnp.float32) + b1
        h = jnp.maximum(h, 0.0)
        return jnp.dot(h.astype(jnp.bfloat16), w2.astype(jnp.bfloat16),
                       preferred_element_type=jnp.float32) + b2

    # --- default bf16 inference path, single small batch -----------------------
    params = prepare_params(w1, b1, w2, b2)
    y = two_layer_net(x, *params)
    jax.block_until_ready(y)
    assert y.shape == (N, D_out) and y.dtype == x.dtype
    assert jnp.allclose(y, ref_bf16(x), atol=2e-3, rtol=2e-3)
    assert jnp.allclose(y, ref_f32(x), atol=5e-2, rtol=5e-2)

    # --- larger batch: multiple tiles incl. a partial trailing tile ------------
    N2 = 300
    x2 = jax.random.normal(kx2, (N2, D_in), jnp.float32)
    y2 = two_layer_net(x2, *params)
    jax.block_until_ready(y2)
    assert y2.shape == (N2, D_out)
    assert jnp.allclose(y2, ref_bf16(x2), atol=2e-3, rtol=2e-3)

    # --- forced hidden-axis tiling (exercises the v7x large-layer fallback) ----
    y3 = two_layer_net(x2, *params, hidden_block=128)
    jax.block_until_ready(y3)
    assert jnp.allclose(y3, ref_bf16(x2), atol=2e-3, rtol=2e-3)

    # --- bf16 output (halves writeback bytes) -----------------------------------
    y4 = two_layer_net(x2, *params, out_dtype=jnp.bfloat16)
    jax.block_until_ready(y4)
    assert y4.dtype == jnp.bfloat16
    assert jnp.allclose(y4.astype(jnp.float32), ref_bf16(x2), atol=2e-2, rtol=2e-2)

    # --- f32 compute escape hatch (no bf16 precision drop) ---------------------
    params_f32 = prepare_params(w1, b1, w2, b2, compute_dtype=jnp.float32)
    y5 = two_layer_net(x, *params_f32)
    jax.block_until_ready(y5)
    assert jnp.allclose(y5, ref_f32(x), atol=2e-2, rtol=2e-2)

    print("KERNEL_OK")
</pallas_src>

<mosaic_0001>
module attributes {stable_mosaic.version = 11 : i64} {
  func.func @_fused_kernel(%arg0: i32, %arg1: memref<16x64xf32, #tpu.memory_space<vmem>>, %arg2: memref<64x256xbf16, #tpu.memory_space<vmem>>, %arg3: memref<1x256xf32, #tpu.memory_space<vmem>>, %arg4: memref<256x32xbf16, #tpu.memory_space<vmem>>, %arg5: memref<1x32xf32, #tpu.memory_space<vmem>>, %arg6: memref<16x32xf32, #tpu.memory_space<vmem>>) attributes {dimension_semantics = [#tpu.dimension_semantics<parallel>], iteration_bounds = array<i64: 1>, scalar_prefetch = 0 : i64, scratch_operands = 0 : i64, tpu.core_type = #tpu.core_type<tc>, window_params = [{transform_indices = @transform_0, window_bounds = array<i64: 16, 64>}, {pipeline_mode = #tpu.pipeline_mode<synchronous>, transform_indices = @transform_1, window_bounds = array<i64: 64, 256>}, {pipeline_mode = #tpu.pipeline_mode<synchronous>, transform_indices = @transform_2, window_bounds = array<i64: 1, 256>}, {pipeline_mode = #tpu.pipeline_mode<synchronous>, transform_indices = @transform_3, window_bounds = array<i64: 256, 32>}, {pipeline_mode = #tpu.pipeline_mode<synchronous>, transform_indices = @transform_4, window_bounds = array<i64: 1, 32>}, {transform_indices = @transform_5, window_bounds = array<i64: 16, 32>}]} {
    %c0 = arith.constant 0 : index
    %c0_0 = arith.constant 0 : index
    %0 = vector.load %arg1[%c0, %c0_0] : memref<16x64xf32, #tpu.memory_space<vmem>>, vector<16x64xf32>
    %1 = arith.truncf %0 : vector<16x64xf32> to vector<16x64xbf16>
    %c0_1 = arith.constant 0 : index
    %c0_2 = arith.constant 0 : index
    %2 = vector.load %arg2[%c0_1, %c0_2] : memref<64x256xbf16, #tpu.memory_space<vmem>>, vector<64x256xbf16>
    %cst = arith.constant dense<0.000000e+00> : vector<16x256xf32>
    %3 = tpu.matmul %1, %2, %cst {dimension_numbers = #tpu.dot_dimension_numbers<[1], [0], [0], [1], [0, 0, 1, 1], [], []>} : vector<16x64xbf16>, vector<64x256xbf16>, vector<16x256xf32> -> vector<16x256xf32>
    %c0_3 = arith.constant 0 : index
    %c0_4 = arith.constant 0 : index
    %4 = vector.load %arg3[%c0_3, %c0_4] : memref<1x256xf32, #tpu.memory_space<vmem>>, vector<1x256xf32>
    %5 = vector.broadcast %4 : vector<1x256xf32> to vector<16x256xf32>
    %6 = arith.addf %3, %5 : vector<16x256xf32>
    %cst_5 = arith.constant 0.000000e+00 : f32
    %7 = vector.broadcast %cst_5 : f32 to vector<16x256xf32>
    %8 = arith.maximumf %6, %7 : vector<16x256xf32>
    %9 = arith.truncf %8 : vector<16x256xf32> to vector<16x256xbf16>
    %c0_6 = arith.constant 0 : index
    %c0_7 = arith.constant 0 : index
    %10 = vector.load %arg4[%c0_6, %c0_7] : memref<256x32xbf16, #tpu.memory_space<vmem>>, vector<256x32xbf16>
    %cst_8 = arith.constant dense<0.000000e+00> : vector<16x32xf32>
    %11 = tpu.matmul %9, %10, %cst_8 {dimension_numbers = #tpu.dot_dimension_numbers<[1], [0], [0], [1], [0, 0, 1, 1], [], []>} : vector<16x256xbf16>, vector<256x32xbf16>, vector<16x32xf32> -> vector<16x32xf32>
    %c0_9 = arith.constant 0 : index
    %c0_10 = arith.constant 0 : index
    %12 = vector.load %arg5[%c0_9, %c0_10] : memref<1x32xf32, #tpu.memory_space<vmem>>, vector<1x32xf32>
    %13 = vector.broadcast %12 : vector<1x32xf32> to vector<16x32xf32>
    %14 = arith.addf %11, %13 : vector<16x32xf32>
    %c0_11 = arith.constant 0 : index
    %c0_12 = arith.constant 0 : index
    %15 = vector.load %arg6[%c0_11, %c0_12] : memref<16x32xf32, #tpu.memory_space<vmem>>, vector<16x32xf32>
    tpu.vector_store %arg6[%c0_11, %c0_12], %14 {strides = array<i32>} : memref<16x32xf32, #tpu.memory_space<vmem>>, vector<16x32xf32>,
    return
  }
  func.func @transform_0(%arg0: i32) -> (i32, i32) {
    %c0_i32 = arith.constant 0 : i32
    %c0_i32_0 = arith.constant 0 : i32
    return %arg0, %c0_i32 : i32, i32
  }
  func.func @transform_1(%arg0: i32) -> (i32, i32) {
    %c0_i32 = arith.constant 0 : i32
    %c0_i32_0 = arith.constant 0 : i32
    %c0_i32_1 = arith.constant 0 : i32
    return %c0_i32, %c0_i32_0 : i32, i32
  }
  func.func @transform_2(%arg0: i32) -> (i32, i32) {
    %c0_i32 = arith.constant 0 : i32
    %c0_i32_0 = arith.constant 0 : i32
    %c0_i32_1 = arith.constant 0 : i32
    return %c0_i32, %c0_i32_0 : i32, i32
  }
  func.func @transform_3(%arg0: i32) -> (i32, i32) {
    %c0_i32 = arith.constant 0 : i32
    %c0_i32_0 = arith.constant 0 : i32
    %c0_i32_1 = arith.constant 0 : i32
    return %c0_i32, %c0_i32_0 : i32, i32
  }
  func.func @transform_4(%arg0: i32) -> (i32, i32) {
    %c0_i32 = arith.constant 0 : i32
    %c0_i32_0 = arith.constant 0 : i32
    %c0_i32_1 = arith.constant 0 : i32
    return %c0_i32, %c0_i32_0 : i32, i32
  }
  func.func @transform_5(%arg0: i32) -> (i32, i32) {
    %c0_i32 = arith.constant 0 : i32
    %c0_i32_0 = arith.constant 0 : i32
    return %arg0, %c0_i32 : i32, i32
  }
}

module attributes {stable_mosaic.version = 11 : i64} {
  func.func @_fused_kernel(%arg0: i32, %arg1: memref<16x64xf32, #tpu.memory_space<vmem>>, %arg2: memref<64x256xbf16, #tpu.memory_space<vmem>>, %arg3: memref<1x256xf32, #tpu.memory_space<vmem>>, %arg4: memref<256x32xbf16, #tpu.memory_space<vmem>>, %arg5: memref<1x32xf32, #tpu.memory_space<vmem>>, %arg6: memref<16x32xf32, #tpu.memory_space<vmem>>) attributes {dimension_semantics = [#tpu.dimension_semantics<parallel>], iteration_bounds = array<i64: 1>, scalar_prefetch = 0 : i64, scratch_operands = 0 : i64, tpu.core_type = #tpu.core_type<tc>, window_params = [{transform_indices = @transform_0, window_bounds = array<i64: 16, 64>}, {pipeline_mode = #tpu.pipeline_mode<synchronous>, transform_indices = @transform_1, window_bounds = array<i64: 64, 256>}, {pipeline_mode = #tpu.pipeline_mode<synchronous>, transform_indices = @transform_2, window_bounds = array<i64: 1, 256>}, {pipeline_mode = #tpu.pipeline_mode<synchronous>, transform_indices = @transform_3, window_bounds = array<i64: 256, 32>}, {pipeline_mode = #tpu.pipeline_mode<synchronous>, transform_indices = @transform_4, window_bounds = array<i64: 1, 32>}, {transform_indices = @transform_5, window_bounds = array<i64: 16, 32>}]} {
    %c0 = arith.constant 0 : index
    %c0_0 = arith.constant 0 : index
    %0 = vector.load %arg1[%c0, %c0_0] : memref<16x64xf32, #tpu.memory_space<vmem>>, vector<16x64xf32>
    %1 = arith.truncf %0 : vector<16x64xf32> to vector<16x64xbf16>
    %c0_1 = arith.constant 0 : index
    %c0_2 = arith.constant 0 : index
    %2 = vector.load %arg2[%c0_1, %c0_2] : memref<64x256xbf16, #tpu.memory_space<vmem>>, vector<64x256xbf16>
    %cst = arith.constant dense<0.000000e+00> : vector<16x256xf32>
    %3 = tpu.matmul %1, %2, %cst {dimension_numbers = #tpu.dot_dimension_numbers<[1], [0], [0], [1], [0, 0, 1, 1], [], []>} : vector<16x64xbf16>, vector<64x256xbf16>, vector<16x256xf32> -> vector<16x256xf32>
    %c0_3 = arith.constant 0 : index
    %c0_4 = arith.constant 0 : index
    %4 = vector.load %arg3[%c0_3, %c0_4] : memref<1x256xf32, #tpu.memory_space<vmem>>, vector<1x256xf32>
    %5 = vector.broadcast %4 : vector<1x256xf32> to vector<16x256xf32>
    %6 = arith.addf %3, %5 : vector<16x256xf32>
    %cst_5 = arith.constant 0.000000e+00 : f32
    %7 = vector.broadcast %cst_5 : f32 to vector<16x256xf32>
    %8 = arith.maximumf %6, %7 : vector<16x256xf32>
    %9 = arith.truncf %8 : vector<16x256xf32> to vector<16x256xbf16>
    %c0_6 = arith.constant 0 : index
    %c0_7 = arith.constant 0 : index
    %10 = vector.load %arg4[%c0_6, %c0_7] : memref<256x32xbf16, #tpu.memory_space<vmem>>, vector<256x32xbf16>
    %cst_8 = arith.constant dense<0.000000e+00> : vector<16x32xf32>
    %11 = tpu.matmul %9, %10, %cst_8 {dimension_numbers = #tpu.dot_dimension_numbers<[1], [0], [0], [1], [0, 0, 1, 1], [], []>} : vector<16x256xbf16>, vector<256x32xbf16>, vector<16x32xf32> -> vector<16x32xf32>
    %c0_9 = arith.constant 0 : index
    %c0_10 = arith.constant 0 : index
    %12 = vector.load %arg5[%c0_9, %c0_10] : memref<1x32xf32, #tpu.memory_space<vmem>>, vector<1x32xf32>
    %13 = vector.broadcast %12 : vector<1x32xf32> to vector<16x32xf32>
    %14 = arith.addf %11, %13 : vector<16x32xf32>
    %c0_11 = arith.constant 0 : index
    %c0_12 = arith.constant 0 : index
    %15 = vector.load %arg6[%c0_11, %c0_12] : memref<16x32xf32, #tpu.memory_space<vmem>>, vector<16x32xf32>
    tpu.vector_store %arg6[%c0_11, %c0_12], %14 {strides = array<i32>} : memref<16x32xf32, #tpu.memory_space<vmem>>, vector<16x32xf32>,
    return
  }
  func.func @transform_0(%arg0: i32) -> (i32, i32) {
    %c0_i32 = arith.constant 0 : i32
    %c0_i32_0 = arith.constant 0 : i32
    return %arg0, %c0_i32 : i32, i32
  }
  func.func @transform_1(%arg0: i32) -> (i32, i32) {
    %c0_i32 = arith.constant 0 : i32
    %c0_i32_0 = arith.constant 0 : i32
    %c0_i32_1 = arith.constant 0 : i32
    return %c0_i32, %c0_i32_0 : i32, i32
  }
  func.func @transform_2(%arg0: i32) -> (i32, i32) {
    %c0_i32 = arith.constant 0 : i32
    %c0_i32_0 = arith.constant 0 : i32
    %c0_i32_1 = arith.constant 0 : i32
    return %c0_i32, %c0_i32_0 : i32, i32
  }
  func.func @transform_3(%arg0: i32) -> (i32, i32) {
    %c0_i32 = arith.constant 0 : i32
    %c0_i32_0 = arith.constant 0 : i32
    %c0_i32_1 = arith.constant 0 : i32
    return %c0_i32, %c0_i32_0 : i32, i32
  }
  func.func @transform_4(%arg0: i32) -> (i32, i32) {
    %c0_i32 = arith.constant 0 : i32
    %c0_i32_0 = arith.constant 0 : i32
    %c0_i32_1 = arith.constant 0 : i32
    return %c0_i32, %c0_i32_0 : i32, i32
  }
  func.func @transform_5(%arg0: i32) -> (i32, i32) {
    %c0_i32 = arith.constant 0 : i32
    %c0_i32_0 = arith.constant 0 : i32
    return %arg0, %c0_i32 : i32, i32
  }
}

</mosaic_0001>

<llo_original>
// kernel: tpu_custom_call.1
$region0: #{tpu_custom_call.1}
  #allocation0 [shape = 'u32[]', space=smem, size = 0x4, offset = 0x4, fixed_abs, tag = 'smem constant byte address 0x4 - core index']
  #allocation1 [shape = 'u32[144,128]{1,0:T(1,128)}', space=vmem, size = 0x12000, scoped, tag = 'internal scratch']
  %s0 = inlined_call_operand.vmem [shape: f32[8,64], index: 0, kind: input, shape index: {}]
  %s1 = inlined_call_operand.vmem [shape: bf16[64,256], index: 1, kind: input, shape index: {}]
  %s2 = inlined_call_operand.vmem [shape: f32[1,256], index: 2, kind: input, shape index: {}]
  %s3 = inlined_call_operand.vmem [shape: bf16[256,32], index: 3, kind: input, shape index: {}]
  %s4 = inlined_call_operand.vmem [shape: f32[1,32], index: 4, kind: input, shape index: {}]
  %s5 = inlined_call_operand.hbm [shape: f32[8,32], index: 5, kind: output, shape index: {}]
  %s6 = sld [smem:[#allocation0]]
  $region30: #{tpu_custom_call.1} parent=0
    _
  %s8 = ssub.s32 1, %s6
  %s9 = scalar_select 0, %s8, %s6
  $region1: #{tpu_custom_call.1} parent=0
    #allocation2 [shape = 'u8[8192]{0}', space=vmem, size = 0x2000, scoped, tag = 'output window, operand 0, single buffered']
    #allocation3 [shape = 's32[1]{0}', space=sflag, size = 0x4, scoped, tag = 'scoped memory for tpu_custom_call.1']
    %10 = vsyncpa [#allocation3], 0
    // Predicated region
    $region2: #{tpu_custom_call.1} parent=1 // pred_check
      _
    $region3: #{tpu_custom_call.1} parent=1 // pred_check_branch
      %12 = sbr.rel (0) target = $region5
    $region4: #{tpu_custom_call.1} parent=1 // pred_region
      _
    $region5: #{tpu_custom_call.1} parent=1 // pred_fallthru
      _
    // Predicated region
    $region6: #{tpu_custom_call.1} parent=1 // pred_check
      _
    $region7: #{tpu_custom_call.1} parent=1 // pred_check_branch
      %14 = sbr.rel (0) target = $region9
    $region8: #{tpu_custom_call.1} parent=1 // pred_region
      _
    $region9: #{tpu_custom_call.1} parent=1 // pred_fallthru
      _
    // Predicated region
    $region10: #{tpu_custom_call.1} parent=1 // pred_check
      _
    $region11: #{tpu_custom_call.1} parent=1 // pred_check_branch
      %16 = sbr.rel (0) target = $region13
    $region12: #{tpu_custom_call.1} parent=1 // pred_region
      _
    $region13: #{tpu_custom_call.1} parent=1 // pred_fallthru
      _
    // Predicated region
    $region14: #{tpu_custom_call.1} parent=1 // pred_check
      _
    $region15: #{tpu_custom_call.1} parent=1 // pred_check_branch
      %18 = sbr.rel (0) target = $region17
    $region16: #{tpu_custom_call.1} parent=1 // pred_region
      _
    $region17: #{tpu_custom_call.1} parent=1 // pred_fallthru
      _
    // Predicated region
    $region18: #{tpu_custom_call.1} parent=1 // pred_check
      _
    $region19: #{tpu_custom_call.1} parent=1 // pred_check_branch
      %20 = sbr.rel (0) target = $region21
    $region20: #{tpu_custom_call.1} parent=1 // pred_region
      _
    $region21: #{tpu_custom_call.1} parent=1 // pred_fallthru
      _
    %v22 = vld [vmem:[%s0] sm:$0xff]
    %v23 = vld [vmem:[%s0 + $0x8] sm:$0xff]
    %v24 = vpack.c.bf16 %v23, %v22
    %v25 = vld [vmem:[%s1] sm:$0xff]
    %v26 = vld [vmem:[%s1 + $0x8] sm:$0xff]
    %v27 = vld [vmem:[%s1 + $0x10] sm:$0xff]
    %v28 = vld [vmem:[%s1 + $0x18] sm:$0xff]
    %v29 = vld [vmem:[%s1 + $0x20] sm:$0xff]
    %v30 = vld [vmem:[%s1 + $0x28] sm:$0xff]
    %v31 = vld [vmem:[%s1 + $0x30] sm:$0xff]
    %v32 = vld [vmem:[%s1 + $0x38] sm:$0xff]
    %v33 = vld [vmem:[%s2] sm:$0x3]
    %v35 = vlaneseq
    %v36 = vshrl.u32 %v35, 7
    %v37 = vsub.s32 0, %v36
    %v38 = vrot.slane %v33, %v37
    %v39 = vlaneseq
    %v40 = vshrl.u32 %v39, 7
    %v41 = vsub.s32 1, %v40
    %v42 = vrot.slane %v33, %v41
    %v53 = vunpack.c.l.b16 %v25
    %v54 = vunpack.c.h.b16 %v25
    %v55 = vunpack.c.l.b16 %v26
    %v56 = vunpack.c.h.b16 %v26
    %v57 = vunpack.c.l.b16 %v27
    %v58 = vunpack.c.h.b16 %v27
    %v59 = vunpack.c.l.b16 %v28
    %v60 = vunpack.c.h.b16 %v28
    %v61 = vunpack.c.l.b16 %v29
    %v62 = vunpack.c.h.b16 %v29
    %v63 = vunpack.c.l.b16 %v30
    %v64 = vunpack.c.h.b16 %v30
    %v65 = vunpack.c.l.b16 %v31
    %v66 = vunpack.c.h.b16 %v31
    %v67 = vunpack.c.l.b16 %v32
    %v68 = vunpack.c.h.b16 %v32
    %v69 = vpack.c.b16 %v55, %v53
    %v70 = vpack.c.b16 %v56, %v54
    %v71 = vpack.c.b16 %v59, %v57
    %v72 = vpack.c.b16 %v60, %v58
    %v73 = vpack.c.b16 %v63, %v61
    %v74 = vpack.c.b16 %v64, %v62
    %v75 = vpack.c.b16 %v67, %v65
    %v76 = vpack.c.b16 %v68, %v66
    %vm85 = vcmask 523264
    %v87 = vsel %vm85, %v24, 0
    %89 = vmatprep.subr.bf16.mxu0 %v70
    %90 = vmatpush1.bf16.msra.mxu0 %v69
    %91 = vmatprep.subr.bf16.mxu0 %v72
    %92 = vmatpush1.bf16.msra.mxu0 %v71
    %93 = vmatprep.subr.bf16.mxu0 %v74
    %94 = vmatpush1.bf16.msra.mxu0 %v73
    %95 = vmatprep.subr.bf16.mxu0 %v76
    %96 = vmatpush1.bf16.msra.mxu0 %v75
    %97 = vmatprep.subr.bf16.mxu0 0
    %98 = vmatpush1.bf16.msra.mxu0 0
    %99 = vmatprep.subr.bf16.mxu0 0
    %100 = vmatpush1.bf16.msra.mxu0 0
    %101 = vmatprep.subr.bf16.mxu0 0
    %102 = vmatpush1.bf16.msra.mxu0 0
    %103 = vmatprep.subr.bf16.mxu0 0
    %104 = vmatpush1.bf16.msra.mxu0 0
    %105 = vmatprep.subr.bf16.mxu0 0
    %106 = vmatpush1.bf16.msra.mxu0 0
    %107 = vmatprep.subr.bf16.mxu0 0
    %108 = vmatpush1.bf16.msra.mxu0 0
    %109 = vmatprep.subr.bf16.mxu0 0
    %110 = vmatpush1.bf16.msra.mxu0 0
    %111 = vmatprep.subr.bf16.mxu0 0
    %112 = vmatpush1.bf16.msra.mxu0 0
    %113 = vmatprep.subr.bf16.mxu0 0
    %114 = vmatpush1.bf16.msra.mxu0 0
    %115 = vmatprep.subr.bf16.mxu0 0
    %116 = vmatpush1.bf16.msra.mxu0 0
    %117 = vmatprep.subr.bf16.mxu0 0
    %118 = vmatpush1.bf16.msra.mxu0 0
    %119 = vmatprep.subr.bf16.mxu0 0
    %120 = vmatpush1.bf16.msra.mxu0 0
    %121 = vmatprep.mubr.bf16.mxu0 0
    %122 = vmatmul.mubr.bf16.gmra.mrb[0].mxu0 %v87
    %v123 = vpop.f32.mrb[0].mxu0
    %v124 = vadd.f32 %v38, %v123
    %v125 = vpop.f32.mrb[0].mxu0
    %v126 = vadd.f32 %v42, %v125
    %v127 = vpop.f32.mrb[0].mxu0
    %v128 = vadd.f32 %v38, %v127
    %v129 = vpop.f32.mrb[0].mxu0
    %v130 = vadd.f32 %v42, %v129
    %131 = vdwg.mxu0
    %v132 = vmax.f32 %v124, 0.0
    %v133 = vmax.f32 %v126, 0.0
    %v134 = vmax.f32 %v128, 0.0
    %v135 = vmax.f32 %v130, 0.0
    %v136 = vpack.c.bf16 %v134, %v132
    %v137 = vpack.c.bf16 %v135, %v133
    %v138 = vld [vmem:[%s3] sm:$0xf]
    %v139 = vld [vmem:[%s3 + $0x4] sm:$0xf]
    %v140 = vld [vmem:[%s3 + $0x8] sm:$0xf]
    %v141 = vld [vmem:[%s3 + $0xc] sm:$0xf]
    %v142 = vld [vmem:[%s3 + $0x10] sm:$0xf]
    %v143 = vld [vmem:[%s3 + $0x14] sm:$0xf]
    %v144 = vld [vmem:[%s3 + $0x18] sm:$0xf]
    %v145 = vld [vmem:[%s3 + $0x1c] sm:$0xf]
    %v146 = vld [vmem:[%s3 + $0x20] sm:$0xf]
    %v147 = vld [vmem:[%s3 + $0x24] sm:$0xf]
    %v148 = vld [vmem:[%s3 + $0x28] sm:$0xf]
    %v149 = vld [vmem:[%s3 + $0x2c] sm:$0xf]
    %v150 = vld [vmem:[%s3 + $0x30] sm:$0xf]
    %v151 = vld [vmem:[%s3 + $0x34] sm:$0xf]
    %v152 = vld [vmem:[%s3 + $0x38] sm:$0xf]
    %v153 = vld [vmem:[%s3 + $0x3c] sm:$0xf]
    %v154 = vld [vmem:[%s3 + $0x40] sm:$0xf]
    %v155 = vld [vmem:[%s3 + $0x44] sm:$0xf]
    %v156 = vld [vmem:[%s3 + $0x48] sm:$0xf]
    %v157 = vld [vmem:[%s3 + $0x4c] sm:$0xf]
    %v158 = vld [vmem:[%s3 + $0x50] sm:$0xf]
    %v159 = vld [vmem:[%s3 + $0x54] sm:$0xf]
    %v160 = vld [vmem:[%s3 + $0x58] sm:$0xf]
    %v161 = vld [vmem:[%s3 + $0x5c] sm:$0xf]
    %v162 = vld [vmem:[%s3 + $0x60] sm:$0xf]
    %v163 = vld [vmem:[%s3 + $0x64] sm:$0xf]
    %v164 = vld [vmem:[%s3 + $0x68] sm:$0xf]
    %v165 = vld [vmem:[%s3 + $0x6c] sm:$0xf]
    %v166 = vld [vmem:[%s3 + $0x70] sm:$0xf]
    %v167 = vld [vmem:[%s3 + $0x74] sm:$0xf]
    %v168 = vld [vmem:[%s3 + $0x78] sm:$0xf]
    %v169 = vld [vmem:[%s3 + $0x7c] sm:$0xf]
    %v170 = vld [vmem:[%s4] sm:$0x1]
    %v172 = vlaneseq
    %v173 = vshrl.u32 %v172, 7
    %v174 = vsub.s32 0, %v173
    %v175 = vrot.slane %v170, %v174
    %v209 = vunpack.c.l.b16 %v138
    %v210 = vunpack.c.l.b16 %v139
    %v211 = vunpack.c.l.b16 %v140
    %v212 = vunpack.c.l.b16 %v141
    %v213 = vunpack.c.l.b16 %v142
    %v214 = vunpack.c.l.b16 %v143
    %v215 = vunpack.c.l.b16 %v144
    %v216 = vunpack.c.l.b16 %v145
    %v217 = vunpack.c.l.b16 %v146
    %v218 = vunpack.c.l.b16 %v147
    %v219 = vunpack.c.l.b16 %v148
    %v220 = vunpack.c.l.b16 %v149
    %v221 = vunpack.c.l.b16 %v150
    %v222 = vunpack.c.l.b16 %v151
    %v223 = vunpack.c.l.b16 %v152
    %v224 = vunpack.c.l.b16 %v153
    %v225 = vunpack.c.l.b16 %v154
    %v226 = vunpack.c.l.b16 %v155
    %v227 = vunpack.c.l.b16 %v156
    %v228 = vunpack.c.l.b16 %v157
    %v229 = vunpack.c.l.b16 %v158
    %v230 = vunpack.c.l.b16 %v159
    %v231 = vunpack.c.l.b16 %v160
    %v232 = vunpack.c.l.b16 %v161
    %v233 = vunpack.c.l.b16 %v162
    %v234 = vunpack.c.l.b16 %v163
    %v235 = vunpack.c.l.b16 %v164
    %v236 = vunpack.c.l.b16 %v165
    %v237 = vunpack.c.l.b16 %v166
    %v238 = vunpack.c.l.b16 %v167
    %v239 = vunpack.c.l.b16 %v168
    %v240 = vunpack.c.l.b16 %v169
    %v241 = vpack.c.b16 %v210, %v209
    %v242 = vpack.c.b16 %v212, %v211
    %v243 = vpack.c.b16 %v214, %v213
    %v244 = vpack.c.b16 %v216, %v215
    %v245 = vpack.c.b16 %v218, %v217
    %v246 = vpack.c.b16 %v220, %v219
    %v247 = vpack.c.b16 %v222, %v221
    %v248 = vpack.c.b16 %v224, %v223
    %v249 = vpack.c.b16 %v226, %v225
    %v250 = vpack.c.b16 %v228, %v227
    %v251 = vpack.c.b16 %v230, %v229
    %v252 = vpack.c.b16 %v232, %v231
    %v253 = vpack.c.b16 %v234, %v233
    %v254 = vpack.c.b16 %v236, %v235
    %v255 = vpack.c.b16 %v238, %v237
    %v256 = vpack.c.b16 %v240, %v239
    %273 = vmatprep.subr.bf16.mxu0 0
    %274 = vmatpush1.bf16.msra.mxu0 %v241
    %275 = vmatprep.subr.bf16.mxu0 0
    %276 = vmatpush1.bf16.msra.mxu0 %v242
    %277 = vmatprep.subr.bf16.mxu0 0
    %278 = vmatpush1.bf16.msra.mxu0 %v243
    %279 = vmatprep.subr.bf16.mxu0 0
    %280 = vmatpush1.bf16.msra.mxu0 %v244
    %281 = vmatprep.subr.bf16.mxu0 0
    %282 = vmatpush1.bf16.msra.mxu0 %v245
    %283 = vmatprep.subr.bf16.mxu0 0
    %284 = vmatpush1.bf16.msra.mxu0 %v246
    %285 = vmatprep.subr.bf16.mxu0 0
    %286 = vmatpush1.bf16.msra.mxu0 %v247
    %287 = vmatprep.subr.bf16.mxu0 0
    %288 = vmatpush1.bf16.msra.mxu0 %v248
    %289 = vmatprep.subr.bf16.mxu0 0
    %290 = vmatpush1.bf16.msra.mxu0 %v249
    %291 = vmatprep.subr.bf16.mxu0 0
    %292 = vmatpush1.bf16.msra.mxu0 %v250
    %293 = vmatprep.subr.bf16.mxu0 0
    %294 = vmatpush1.bf16.msra.mxu0 %v251
    %295 = vmatprep.subr.bf16.mxu0 0
    %296 = vmatpush1.bf16.msra.mxu0 %v252
    %297 = vmatprep.subr.bf16.mxu0 0
    %298 = vmatpush1.bf16.msra.mxu0 %v253
    %299 = vmatprep.subr.bf16.mxu0 0
    %300 = vmatpush1.bf16.msra.mxu0 %v254
    %301 = vmatprep.subr.bf16.mxu0 0
    %302 = vmatpush1.bf16.msra.mxu0 %v255
    %303 = vmatprep.subr.bf16.mxu0 0
    %304 = vmatpush1.bf16.msra.mxu0 %v256
    %305 = vmatprep.mubr.bf16.mxu0 %v137
    %306 = vmatmul.mubr.bf16.gmra.mrb[0].mxu0 %v136
    %v307 = vpop.f32.mrb[0].mxu0
    %v308 = vadd.f32 %v175, %v307
    %v309 = vpop.f32.mrb[0].mxu0
    %v310 = vpop.f32.mrb[0].mxu0
    %v311 = vadd.f32 %v175, %v310
    %v312 = vpop.f32.mrb[0].mxu0
    %313 = vdwg.mxu0
    %vm314 = vcmask 261120
    %315 = vst.msk [vmem:[#allocation2] sm:$0xff] %vm314, %v308
    %316 = vst.msk [vmem:[#allocation2 + $0x8] sm:$0xff] %vm314, %v311
    // Predicated region
    $region22: #{tpu_custom_call.1} parent=1 // pred_check
      _
    $region23: #{tpu_custom_call.1} parent=1 // pred_check_branch
      %318 = sbr.rel (0) target = $region25
    $region24: #{tpu_custom_call.1} parent=1 // pred_region
      %s320 = ssub.s32 256, 128
      %321 = vsyncadd [#allocation3], %s320
      %s322 = sshll.u32 [#allocation2], 4
      %s323 = int_to_ptr.vmem [resolvable:$true] %s322
      %328 = dma.vmem_to_hbm [thread:$0]  %s323, 128, %s5, [#allocation3], 128, 128, 8
    $region25: #{tpu_custom_call.1} parent=1 // pred_fallthru
      _
    // Predicated region
    $region26: #{tpu_custom_call.1} parent=1 // pred_check
      _
    $region27: #{tpu_custom_call.1} parent=1 // pred_check_branch
      %330 = sbr.rel (0) target = $region29
    $region28: #{tpu_custom_call.1} parent=1 // pred_region
      %331 = dma.done [#allocation3], 256
    $region29: #{tpu_custom_call.1} parent=1 // pred_fallthru
      _
    %332 = vsyncpa [#allocation3], 1

// kernel: tpu_custom_call.1
$region0: #{tpu_custom_call.1}
  #allocation0 [shape = 'u32[]', space=smem, size = 0x4, offset = 0x4, fixed_abs, tag = 'smem constant byte address 0x4 - core index']
  #allocation1 [shape = 'u32[144,128]{1,0:T(1,128)}', space=vmem, size = 0x12000, scoped, tag = 'internal scratch']
  %s0 = inlined_call_operand.vmem [shape: f32[8,64], index: 0, kind: input, shape index: {}]
  %s1 = inlined_call_operand.vmem [shape: bf16[64,256], index: 1, kind: input, shape index: {}]
  %s2 = inlined_call_operand.vmem [shape: f32[1,256], index: 2, kind: input, shape index: {}]
  %s3 = inlined_call_operand.vmem [shape: bf16[256,32], index: 3, kind: input, shape index: {}]
  %s4 = inlined_call_operand.vmem [shape: f32[1,32], index: 4, kind: input, shape index: {}]
  %s5 = inlined_call_operand.hbm [shape: f32[8,32], index: 5, kind: output, shape index: {}]
  %s6 = sld [smem:[#allocation0]]
  $region30: #{tpu_custom_call.1} parent=0
    _
  %s8 = ssub.s32 1, %s6
  %s9 = scalar_select 0, %s8, %s6
  $region1: #{tpu_custom_call.1} parent=0
    #allocation2 [shape = 'u8[8192]{0}', space=vmem, size = 0x2000, scoped, tag = 'output window, operand 0, single buffered']
    #allocation3 [shape = 's32[1]{0}', space=sflag, size = 0x4, scoped, tag = 'scoped memory for tpu_custom_call.1']
    %10 = vsyncpa [#allocation3], 0
    // Predicated region
    $region2: #{tpu_custom_call.1} parent=1 // pred_check
      _
    $region3: #{tpu_custom_call.1} parent=1 // pred_check_branch
      %12 = sbr.rel (0) target = $region5
    $region4: #{tpu_custom_call.1} parent=1 // pred_region
      _
    $region5: #{tpu_custom_call.1} parent=1 // pred_fallthru
      _
    // Predicated region
    $region6: #{tpu_custom_call.1} parent=1 // pred_check
      _
    $region7: #{tpu_custom_call.1} parent=1 // pred_check_branch
      %14 = sbr.rel (0) target = $region9
    $region8: #{tpu_custom_call.1} parent=1 // pred_region
      _
    $region9: #{tpu_custom_call.1} parent=1 // pred_fallthru
      _
    // Predicated region
    $region10: #{tpu_custom_call.1} parent=1 // pred_check
      _
    $region11: #{tpu_custom_call.1} parent=1 // pred_check_branch
      %16 = sbr.rel (0) target = $region13
    $region12: #{tpu_custom_call.1} parent=1 // pred_region
      _
    $region13: #{tpu_custom_call.1} parent=1 // pred_fallthru
      _
    // Predicated region
    $region14: #{tpu_custom_call.1} parent=1 // pred_check
      _
    $region15: #{tpu_custom_call.1} parent=1 // pred_check_branch
      %18 = sbr.rel (0) target = $region17
    $region16: #{tpu_custom_call.1} parent=1 // pred_region
      _
    $region17: #{tpu_custom_call.1} parent=1 // pred_fallthru
      _
    // Predicated region
    $region18: #{tpu_custom_call.1} parent=1 // pred_check
      _
    $region19: #{tpu_custom_call.1} parent=1 // pred_check_branch
      %20 = sbr.rel (0) target = $region21
    $region20: #{tpu_custom_call.1} parent=1 // pred_region
      _
    $region21: #{tpu_custom_call.1} parent=1 // pred_fallthru
      _
    %v22 = vld [vmem:[%s0] sm:$0xff]
    %v23 = vld [vmem:[%s0 + $0x8] sm:$0xff]
    %v24 = vpack.c.bf16 %v23, %v22
    %v25 = vld [vmem:[%s1] sm:$0xff]
    %v26 = vld [vmem:[%s1 + $0x8] sm:$0xff]
    %v27 = vld [vmem:[%s1 + $0x10] sm:$0xff]
    %v28 = vld [vmem:[%s1 + $0x18] sm:$0xff]
    %v29 = vld [vmem:[%s1 + $0x20] sm:$0xff]
    %v30 = vld [vmem:[%s1 + $0x28] sm:$0xff]
    %v31 = vld [vmem:[%s1 + $0x30] sm:$0xff]
    %v32 = vld [vmem:[%s1 + $0x38] sm:$0xff]
    %v33 = vld [vmem:[%s2] sm:$0x3]
    %v35 = vlaneseq
    %v36 = vshrl.u32 %v35, 7
    %v37 = vsub.s32 0, %v36
    %v38 = vrot.slane %v33, %v37
    %v39 = vlaneseq
    %v40 = vshrl.u32 %v39, 7
    %v41 = vsub.s32 1, %v40
    %v42 = vrot.slane %v33, %v41
    %v53 = vunpack.c.l.b16 %v25
    %v54 = vunpack.c.h.b16 %v25
    %v55 = vunpack.c.l.b16 %v26
    %v56 = vunpack.c.h.b16 %v26
    %v57 = vunpack.c.l.b16 %v27
    %v58 = vunpack.c.h.b16 %v27
    %v59 = vunpack.c.l.b16 %v28
    %v60 = vunpack.c.h.b16 %v28
    %v61 = vunpack.c.l.b16 %v29
    %v62 = vunpack.c.h.b16 %v29
    %v63 = vunpack.c.l.b16 %v30
    %v64 = vunpack.c.h.b16 %v30
    %v65 = vunpack.c.l.b16 %v31
    %v66 = vunpack.c.h.b16 %v31
    %v67 = vunpack.c.l.b16 %v32
    %v68 = vunpack.c.h.b16 %v32
    %v69 = vpack.c.b16 %v55, %v53
    %v70 = vpack.c.b16 %v56, %v54
    %v71 = vpack.c.b16 %v59, %v57
    %v72 = vpack.c.b16 %v60, %v58
    %v73 = vpack.c.b16 %v63, %v61
    %v74 = vpack.c.b16 %v64, %v62
    %v75 = vpack.c.b16 %v67, %v65
    %v76 = vpack.c.b16 %v68, %v66
    %vm85 = vcmask 523264
    %v87 = vsel %vm85, %v24, 0
    %89 = vmatprep.subr.bf16.mxu0 %v70
    %90 = vmatpush1.bf16.msra.mxu0 %v69
    %91 = vmatprep.subr.bf16.mxu0 %v72
    %92 = vmatpush1.bf16.msra.mxu0 %v71
    %93 = vmatprep.subr.bf16.mxu0 %v74
    %94 = vmatpush1.bf16.msra.mxu0 %v73
    %95 = vmatprep.subr.bf16.mxu0 %v76
    %96 = vmatpush1.bf16.msra.mxu0 %v75
    %97 = vmatprep.subr.bf16.mxu0 0
    %98 = vmatpush1.bf16.msra.mxu0 0
    %99 = vmatprep.subr.bf16.mxu0 0
    %100 = vmatpush1.bf16.msra.mxu0 0
    %101 = vmatprep.subr.bf16.mxu0 0
    %102 = vmatpush1.bf16.msra.mxu0 0
    %103 = vmatprep.subr.bf16.mxu0 0
    %104 = vmatpush1.bf16.msra.mxu0 0
    %105 = vmatprep.subr.bf16.mxu0 0
    %106 = vmatpush1.bf16.msra.mxu0 0
    %107 = vmatprep.subr.bf16.mxu0 0
    %108 = vmatpush1.bf16.msra.mxu0 0
    %109 = vmatprep.subr.bf16.mxu0 0
    %110 = vmatpush1.bf16.msra.mxu0 0
    %111 = vmatprep.subr.bf16.mxu0 0
    %112 = vmatpush1.bf16.msra.mxu0 0
    %113 = vmatprep.subr.bf16.mxu0 0
    %114 = vmatpush1.bf16.msra.mxu0 0
    %115 = vmatprep.subr.bf16.mxu0 0
    %116 = vmatpush1.bf16.msra.mxu0 0
    %117 = vmatprep.subr.bf16.mxu0 0
    %118 = vmatpush1.bf16.msra.mxu0 0
    %119 = vmatprep.subr.bf16.mxu0 0
    %120 = vmatpush1.bf16.msra.mxu0 0
    %121 = vmatprep.mubr.bf16.mxu0 0
    %122 = vmatmul.mubr.bf16.gmra.mrb[0].mxu0 %v87
    %v123 = vpop.f32.mrb[0].mxu0
    %v124 = vadd.f32 %v38, %v123
    %v125 = vpop.f32.mrb[0].mxu0
    %v126 = vadd.f32 %v42, %v125
    %v127 = vpop.f32.mrb[0].mxu0
    %v128 = vadd.f32 %v38, %v127
    %v129 = vpop.f32.mrb[0].mxu0
    %v130 = vadd.f32 %v42, %v129
    %131 = vdwg.mxu0
    %v132 = vmax.f32 %v124, 0.0
    %v133 = vmax.f32 %v126, 0.0
    %v134 = vmax.f32 %v128, 0.0
    %v135 = vmax.f32 %v130, 0.0
    %v136 = vpack.c.bf16 %v134, %v132
    %v137 = vpack.c.bf16 %v135, %v133
    %v138 = vld [vmem:[%s3] sm:$0xf]
    %v139 = vld [vmem:[%s3 + $0x4] sm:$0xf]
    %v140 = vld [vmem:[%s3 + $0x8] sm:$0xf]
    %v141 = vld [vmem:[%s3 + $0xc] sm:$0xf]
    %v142 = vld [vmem:[%s3 + $0x10] sm:$0xf]
    %v143 = vld [vmem:[%s3 + $0x14] sm:$0xf]
    %v144 = vld [vmem:[%s3 + $0x18] sm:$0xf]
    %v145 = vld [vmem:[%s3 + $0x1c] sm:$0xf]
    %v146 = vld [vmem:[%s3 + $0x20] sm:$0xf]
    %v147 = vld [vmem:[%s3 + $0x24] sm:$0xf]
    %v148 = vld [vmem:[%s3 + $0x28] sm:$0xf]
    %v149 = vld [vmem:[%s3 + $0x2c] sm:$0xf]
    %v150 = vld [vmem:[%s3 + $0x30] sm:$0xf]
    %v151 = vld [vmem:[%s3 + $0x34] sm:$0xf]
    %v152 = vld [vmem:[%s3 + $0x38] sm:$0xf]
    %v153 = vld [vmem:[%s3 + $0x3c] sm:$0xf]
    %v154 = vld [vmem:[%s3 + $0x40] sm:$0xf]
    %v155 = vld [vmem:[%s3 + $0x44] sm:$0xf]
    %v156 = vld [vmem:[%s3 + $0x48] sm:$0xf]
    %v157 = vld [vmem:[%s3 + $0x4c] sm:$0xf]
    %v158 = vld [vmem:[%s3 + $0x50] sm:$0xf]
    %v159 = vld [vmem:[%s3 + $0x54] sm:$0xf]
    %v160 = vld [vmem:[%s3 + $0x58] sm:$0xf]
    %v161 = vld [vmem:[%s3 + $0x5c] sm:$0xf]
    %v162 = vld [vmem:[%s3 + $0x60] sm:$0xf]
    %v163 = vld [vmem:[%s3 + $0x64] sm:$0xf]
    %v164 = vld [vmem:[%s3 + $0x68] sm:$0xf]
    %v165 = vld [vmem:[%s3 + $0x6c] sm:$0xf]
    %v166 = vld [vmem:[%s3 + $0x70] sm:$0xf]
    %v167 = vld [vmem:[%s3 + $0x74] sm:$0xf]
    %v168 = vld [vmem:[%s3 + $0x78] sm:$0xf]
    %v169 = vld [vmem:[%s3 + $0x7c] sm:$0xf]
    %v170 = vld [vmem:[%s4] sm:$0x1]
    %v172 = vlaneseq
    %v173 = vshrl.u32 %v172, 7
    %v174 = vsub.s32 0, %v173
    %v175 = vrot.slane %v170, %v174
    %v209 = vunpack.c.l.b16 %v138
    %v210 = vunpack.c.l.b16 %v139
    %v211 = vunpack.c.l.b16 %v140
    %v212 = vunpack.c.l.b16 %v141
    %v213 = vunpack.c.l.b16 %v142
    %v214 = vunpack.c.l.b16 %v143
    %v215 = vunpack.c.l.b16 %v144
    %v216 = vunpack.c.l.b16 %v145
    %v217 = vunpack.c.l.b16 %v146
    %v218 = vunpack.c.l.b16 %v147
    %v219 = vunpack.c.l.b16 %v148
    %v220 = vunpack.c.l.b16 %v149
    %v221 = vunpack.c.l.b16 %v150
    %v222 = vunpack.c.l.b16 %v151
    %v223 = vunpack.c.l.b16 %v152
    %v224 = vunpack.c.l.b16 %v153
    %v225 = vunpack.c.l.b16 %v154
    %v226 = vunpack.c.l.b16 %v155
    %v227 = vunpack.c.l.b16 %v156
    %v228 = vunpack.c.l.b16 %v157
    %v229 = vunpack.c.l.b16 %v158
    %v230 = vunpack.c.l.b16 %v159
    %v231 = vunpack.c.l.b16 %v160
    %v232 = vunpack.c.l.b16 %v161
    %v233 = vunpack.c.l.b16 %v162
    %v234 = vunpack.c.l.b16 %v163
    %v235 = vunpack.c.l.b16 %v164
    %v236 = vunpack.c.l.b16 %v165
    %v237 = vunpack.c.l.b16 %v166
    %v238 = vunpack.c.l.b16 %v167
    %v239 = vunpack.c.l.b16 %v168
    %v240 = vunpack.c.l.b16 %v169
    %v241 = vpack.c.b16 %v210, %v209
    %v242 = vpack.c.b16 %v212, %v211
    %v243 = vpack.c.b16 %v214, %v213
    %v244 = vpack.c.b16 %v216, %v215
    %v245 = vpack.c.b16 %v218, %v217
    %v246 = vpack.c.b16 %v220, %v219
    %v247 = vpack.c.b16 %v222, %v221
    %v248 = vpack.c.b16 %v224, %v223
    %v249 = vpack.c.b16 %v226, %v225
    %v250 = vpack.c.b16 %v228, %v227
    %v251 = vpack.c.b16 %v230, %v229
    %v252 = vpack.c.b16 %v232, %v231
    %v253 = vpack.c.b16 %v234, %v233
    %v254 = vpack.c.b16 %v236, %v235
    %v255 = vpack.c.b16 %v238, %v237
    %v256 = vpack.c.b16 %v240, %v239
    %273 = vmatprep.subr.bf16.mxu0 0
    %274 = vmatpush1.bf16.msra.mxu0 %v241
    %275 = vmatprep.subr.bf16.mxu0 0
    %276 = vmatpush1.bf16.msra.mxu0 %v242
    %277 = vmatprep.subr.bf16.mxu0 0
    %278 = vmatpush1.bf16.msra.mxu0 %v243
    %279 = vmatprep.subr.bf16.mxu0 0
    %280 = vmatpush1.bf16.msra.mxu0 %v244
    %281 = vmatprep.subr.bf16.mxu0 0
    %282 = vmatpush1.bf16.msra.mxu0 %v245
    %283 = vmatprep.subr.bf16.mxu0 0
    %284 = vmatpush1.bf16.msra.mxu0 %v246
    %285 = vmatprep.subr.bf16.mxu0 0
    %286 = vmatpush1.bf16.msra.mxu0 %v247
    %287 = vmatprep.subr.bf16.mxu0 0
    %288 = vmatpush1.bf16.msra.mxu0 %v248
    %289 = vmatprep.subr.bf16.mxu0 0
    %290 = vmatpush1.bf16.msra.mxu0 %v249
    %291 = vmatprep.subr.bf16.mxu0 0
    %292 = vmatpush1.bf16.msra.mxu0 %v250
    %293 = vmatprep.subr.bf16.mxu0 0
    %294 = vmatpush1.bf16.msra.mxu0 %v251
    %295 = vmatprep.subr.bf16.mxu0 0
    %296 = vmatpush1.bf16.msra.mxu0 %v252
    %297 = vmatprep.subr.bf16.mxu0 0
    %298 = vmatpush1.bf16.msra.mxu0 %v253
    %299 = vmatprep.subr.bf16.mxu0 0
    %300 = vmatpush1.bf16.msra.mxu0 %v254
    %301 = vmatprep.subr.bf16.mxu0 0
    %302 = vmatpush1.bf16.msra.mxu0 %v255
    %303 = vmatprep.subr.bf16.mxu0 0
    %304 = vmatpush1.bf16.msra.mxu0 %v256
    %305 = vmatprep.mubr.bf16.mxu0 %v137
    %306 = vmatmul.mubr.bf16.gmra.mrb[0].mxu0 %v136
    %v307 = vpop.f32.mrb[0].mxu0
    %v308 = vadd.f32 %v175, %v307
    %v309 = vpop.f32.mrb[0].mxu0
    %v310 = vpop.f32.mrb[0].mxu0
    %v311 = vadd.f32 %v175, %v310
    %v312 = vpop.f32.mrb[0].mxu0
    %313 = vdwg.mxu0
    %vm314 = vcmask 261120
    %315 = vst.msk [vmem:[#allocation2] sm:$0xff] %vm314, %v308
    %316 = vst.msk [vmem:[#allocation2 + $0x8] sm:$0xff] %vm314, %v311
    // Predicated region
    $region22: #{tpu_custom_call.1} parent=1 // pred_check
      _
    $region23: #{tpu_custom_call.1} parent=1 // pred_check_branch
      %318 = sbr.rel (0) target = $region25
    $region24: #{tpu_custom_call.1} parent=1 // pred_region
      %s320 = ssub.s32 256, 128
      %321 = vsyncadd [#allocation3], %s320
      %s322 = sshll.u32 [#allocation2], 4
      %s323 = int_to_ptr.vmem [resolvable:$true] %s322
      %328 = dma.vmem_to_hbm [thread:$0]  %s323, 128, %s5, [#allocation3], 128, 128, 8
    $region25: #{tpu_custom_call.1} parent=1 // pred_fallthru
      _
    // Predicated region
    $region26: #{tpu_custom_call.1} parent=1 // pred_check
      _
    $region27: #{tpu_custom_call.1} parent=1 // pred_check_branch
      %330 = sbr.rel (0) target = $region29
    $region28: #{tpu_custom_call.1} parent=1 // pred_region
      %331 = dma.done [#allocation3], 256
    $region29: #{tpu_custom_call.1} parent=1 // pred_fallthru
      _
    %332 = vsyncpa [#allocation3], 1

</llo_original>
